<compile_context>
chip_gen: v7x
topology: tpu7x:2x2x1
jax: 0.10.0
libtpu: 0.0.40
codegen_flags: <defaults>
</compile_context>

<pallas_src>
import math

import jax
import jax.numpy as jnp
from jax.experimental import pallas as pl
from jax.experimental.pallas import tpu as pltpu

LANE = 128
SUBLANE = 16    # bf16 sublane packing for the output tile
MAX_BM = 512    # largest batch tile; VMEM cost still tiny at this size


def _round_up(x, m):
    return ((x + m - 1) // m) * m


def _choose_tiling(batch):
    """Pick (batch_tile, padded_batch).

    < 256 padded rows: single grid step (overhead-bound regardless).
    >= 256: split into >= 2 steps (v7x megacore) with bm capped at MAX_BM so the
    ~0.35 us/step fixed cost is amortized on v5e/v6e as well.
    """
    padded = _round_up(batch, SUBLANE)
    if padded < 256:
        bm = padded
    else:
        bm = min(MAX_BM, _round_up((padded + 1) // 2, SUBLANE))
    padded_batch = _round_up(padded, bm)
    return bm, padded_batch


def _policy_kernel(x_ref, w1_ref, b1_ref, w2_ref, b2_ref, w3_ref, b3_ref, o_ref):
    """Fused 3-layer MLP on one batch tile; all weights resident in VMEM."""
    # Layer 1: Linear(in_pad, 512) + leaky_relu(0.01).  bf16 MXU, f32 acc.
    x = x_ref[...].astype(w1_ref.dtype)
    h1 = jnp.dot(x, w1_ref[...], preferred_element_type=jnp.float32) + b1_ref[...]
    h1 = jnp.maximum(h1, 0.01 * h1).astype(w2_ref.dtype)

    # Layer 2: Linear(512, 384) + leaky_relu(0.01).
    h2 = jnp.dot(h1, w2_ref[...], preferred_element_type=jnp.float32) + b2_ref[...]
    h2 = jnp.maximum(h2, 0.01 * h2).astype(w3_ref.dtype)

    # Output head: Linear(384, 128) + tanh.  Lane-dense bf16 store.
    out = jnp.dot(h2, w3_ref[...], preferred_element_type=jnp.float32) + b3_ref[...]
    o_ref[...] = jnp.tanh(out).astype(o_ref.dtype)


def policy_forward(states, padded_params, action_dim):
    """states: [B, state_dim] f32 -> mean: [B, action_dim] f32."""
    w1, b1, w2, b2, w3, b3 = padded_params
    batch, state_dim = states.shape
    in_pad = w1.shape[0]
    out_pad = w3.shape[1]

    bm, padded_batch = _choose_tiling(batch)
    pad_rows = padded_batch - batch
    pad_cols = in_pad - state_dim
    if pad_rows or pad_cols:
        states = jnp.pad(states, ((0, pad_rows), (0, pad_cols)))
    grid = (padded_batch // bm,)

    # Weights/biases: full-array blocks with constant index_map -> DMA'd once,
    # kept resident in VMEM across all batch-tile steps.
    def resident(a):
        return pl.BlockSpec(a.shape, lambda i: (0,) * a.ndim)

    out = pl.pallas_call(
        _policy_kernel,
        out_shape=jax.ShapeDtypeStruct((padded_batch, out_pad), jnp.bfloat16),
        grid=grid,
        in_specs=[
            pl.BlockSpec((bm, in_pad), lambda i: (i, 0)),
            resident(w1), resident(b1),
            resident(w2), resident(b2),
            resident(w3), resident(b3),
        ],
        out_specs=pl.BlockSpec((bm, out_pad), lambda i: (i, 0)),
        compiler_params=pltpu.CompilerParams(
            dimension_semantics=("parallel",)),
    )(states, w1, b1, w2, b2, w3, b3)

    # Slice padded rows/lanes off and restore f32 module semantics.  If the
    # consumer can use the padded bf16 [padded_batch, 128] buffer directly,
    # return `out` instead and skip this extra strided XLA copy.
    return out[:batch, :action_dim].astype(jnp.float32)


def init_params(key, state_dim, action_dim):
    """Deterministic init matching torch.nn.Linear's U(-1/sqrt(fan_in), +). f32, unpadded."""
    def linear(k, fan_in, fan_out):
        kw, kb = jax.random.split(k)
        bound = 1.0 / math.sqrt(fan_in)
        w = jax.random.uniform(kw, (fan_in, fan_out), jnp.float32, -bound, bound)
        b = jax.random.uniform(kb, (1, fan_out), jnp.float32, -bound, bound)
        return w, b

    k1, k2, k3 = jax.random.split(key, 3)
    w1, b1 = linear(k1, state_dim, 400)
    w2, b2 = linear(k2, 400, 300)
    w3, b3 = linear(k3, 300, action_dim)
    return (w1, b1, w2, b2, w3, b3)


def prepare_params(raw_params, state_dim, action_dim, weight_dtype=jnp.bfloat16):
    """Zero-pad dims to tile-friendly sizes; cast weights to weight_dtype.

    in: state_dim -> 32-multiple; hidden: 400 -> 512, 300 -> 384 (kept — do not
    pad to 256-multiples, it would regress v5e's MXU-bound path); out -> 128.
    Biases stay f32 (added to the f32 accumulator).
    """
    w1, b1, w2, b2, w3, b3 = raw_params
    in_pad = _round_up(state_dim, 32)
    h1p = _round_up(400, LANE)           # 512
    h2p = _round_up(300, LANE)           # 384
    outp = _round_up(action_dim, LANE)   # 128 for action_dim=6

    def pad2(a, rows, cols):
        return jnp.pad(a, ((0, rows - a.shape[0]), (0, cols - a.shape[1])))

    w1p = pad2(w1, in_pad, h1p).astype(weight_dtype)
    b1p = pad2(b1, 1, h1p)
    w2p = pad2(w2, h1p, h2p).astype(weight_dtype)
    b2p = pad2(b2, 1, h2p)
    w3p = pad2(w3, h2p, outp).astype(weight_dtype)
    b3p = pad2(b3, 1, outp)
    return (w1p, b1p, w2p, b2p, w3p, b3p)


def _reference_matched(states, padded_params, action_dim):
    """Pure-JAX reference using the same padding / dtype scheme as the kernel."""
    w1, b1, w2, b2, w3, b3 = padded_params
    in_pad = w1.shape[0]
    x = jnp.pad(states, ((0, 0), (0, in_pad - states.shape[1]))).astype(w1.dtype)
    h1 = jnp.dot(x, w1, preferred_element_type=jnp.float32) + b1
    h1 = jnp.maximum(h1, 0.01 * h1).astype(w2.dtype)
    h2 = jnp.dot(h1, w2, preferred_element_type=jnp.float32) + b2
    h2 = jnp.maximum(h2, 0.01 * h2).astype(w3.dtype)
    out = jnp.tanh(jnp.dot(h2, w3, preferred_element_type=jnp.float32) + b3)
    return out.astype(jnp.bfloat16)[:, :action_dim].astype(jnp.float32)


def _reference_f32(states, raw_params):
    """Full-precision reference mirroring the PyTorch module semantics."""
    w1, b1, w2, b2, w3, b3 = raw_params
    x = states @ w1 + b1
    x = jnp.where(x > 0, x, 0.01 * x)
    x = x @ w2 + b2
    x = jnp.where(x > 0, x, 0.01 * x)
    return jnp.tanh(x @ w3 + b3)


if __name__ == "__main__":
    key = jax.random.PRNGKey(0)
    k_params, k_states = jax.random.split(key)

    # HalfCheetah-like dimensions: state_dim=17, action_dim=6.
    state_dim, action_dim = 17, 6

    raw_params = init_params(k_params, state_dim, action_dim)
    padded_params = prepare_params(raw_params, state_dim, action_dim)

    # batch=8  -> single-step grid (inference-style);
    # batch=300 -> multi-step grid (exercises the >=2-step / megacore path).
    for batch in (8, 300):
        k_b = jax.random.fold_in(k_states, batch)
        states = jax.random.normal(k_b, (batch, state_dim), jnp.float32)

        mean = policy_forward(states, padded_params, action_dim)
        mean = jax.block_until_ready(mean)
        assert mean.shape == (batch, action_dim)

        # Numerics-matched check against a pure-JAX reference with the same
        # bf16 weights / bf16 output rounding (tolerance covers accumulation
        # order + 1 bf16 ulp).
        ref_matched = _reference_matched(states, padded_params, action_dim)
        assert jnp.allclose(mean, ref_matched, atol=1.5e-2, rtol=0.0), \
            f"batch={batch}: mismatch vs bf16-matched reference"

        # Loose sanity check against the full-f32 PyTorch-semantics reference
        # (difference = bf16 weight quantization + bf16 output rounding).
        ref_f32 = _reference_f32(states, raw_params)
        max_err = float(jnp.max(jnp.abs(mean - ref_f32)))
        assert max_err < 6e-2, \
            f"batch={batch}: bf16 quantization error unexpectedly large: {max_err}"

    print("KERNEL_OK")
</pallas_src>

<mosaic_0001>
module attributes {stable_mosaic.version = 11 : i64} {
  func.func @_policy_kernel(%arg0: i32, %arg1: memref<16x32xf32, #tpu.memory_space<vmem>>, %arg2: memref<32x512xbf16, #tpu.memory_space<vmem>>, %arg3: memref<1x512xf32, #tpu.memory_space<vmem>>, %arg4: memref<512x384xbf16, #tpu.memory_space<vmem>>, %arg5: memref<1x384xf32, #tpu.memory_space<vmem>>, %arg6: memref<384x128xbf16, #tpu.memory_space<vmem>>, %arg7: memref<1x128xf32, #tpu.memory_space<vmem>>, %arg8: memref<16x128xbf16, #tpu.memory_space<vmem>>) attributes {dimension_semantics = [#tpu.dimension_semantics<parallel>], iteration_bounds = array<i64: 1>, scalar_prefetch = 0 : i64, scratch_operands = 0 : i64, tpu.core_type = #tpu.core_type<tc>, window_params = [{transform_indices = @transform_0, window_bounds = array<i64: 16, 32>}, {pipeline_mode = #tpu.pipeline_mode<synchronous>, transform_indices = @transform_1, window_bounds = array<i64: 32, 512>}, {pipeline_mode = #tpu.pipeline_mode<synchronous>, transform_indices = @transform_2, window_bounds = array<i64: 1, 512>}, {pipeline_mode = #tpu.pipeline_mode<synchronous>, transform_indices = @transform_3, window_bounds = array<i64: 512, 384>}, {pipeline_mode = #tpu.pipeline_mode<synchronous>, transform_indices = @transform_4, window_bounds = array<i64: 1, 384>}, {pipeline_mode = #tpu.pipeline_mode<synchronous>, transform_indices = @transform_5, window_bounds = array<i64: 384, 128>}, {pipeline_mode = #tpu.pipeline_mode<synchronous>, transform_indices = @transform_6, window_bounds = array<i64: 1, 128>}, {transform_indices = @transform_7, window_bounds = array<i64: 16, 128>}]} {
    %c0 = arith.constant 0 : index
    %c0_0 = arith.constant 0 : index
    %0 = vector.load %arg1[%c0, %c0_0] : memref<16x32xf32, #tpu.memory_space<vmem>>, vector<16x32xf32>
    %1 = arith.truncf %0 : vector<16x32xf32> to vector<16x32xbf16>
    %c0_1 = arith.constant 0 : index
    %c0_2 = arith.constant 0 : index
    %2 = vector.load %arg2[%c0_1, %c0_2] : memref<32x512xbf16, #tpu.memory_space<vmem>>, vector<32x512xbf16>
    %cst = arith.constant dense<0.000000e+00> : vector<16x512xf32>
    %3 = tpu.matmul %1, %2, %cst {dimension_numbers = #tpu.dot_dimension_numbers<[1], [0], [0], [1], [0, 0, 1, 1], [], []>} : vector<16x32xbf16>, vector<32x512xbf16>, vector<16x512xf32> -> vector<16x512xf32>
    %c0_3 = arith.constant 0 : index
    %c0_4 = arith.constant 0 : index
    %4 = vector.load %arg3[%c0_3, %c0_4] : memref<1x512xf32, #tpu.memory_space<vmem>>, vector<1x512xf32>
    %5 = vector.broadcast %4 : vector<1x512xf32> to vector<16x512xf32>
    %6 = arith.addf %3, %5 : vector<16x512xf32>
    %cst_5 = arith.constant 0.00999999977 : f32
    %7 = vector.broadcast %cst_5 : f32 to vector<16x512xf32>
    %8 = arith.mulf %7, %6 : vector<16x512xf32>
    %9 = arith.maximumf %6, %8 : vector<16x512xf32>
    %10 = arith.truncf %9 : vector<16x512xf32> to vector<16x512xbf16>
    %c0_6 = arith.constant 0 : index
    %c0_7 = arith.constant 0 : index
    %11 = vector.load %arg4[%c0_6, %c0_7] : memref<512x384xbf16, #tpu.memory_space<vmem>>, vector<512x384xbf16>
    %cst_8 = arith.constant dense<0.000000e+00> : vector<16x384xf32>
    %12 = tpu.matmul %10, %11, %cst_8 {dimension_numbers = #tpu.dot_dimension_numbers<[1], [0], [0], [1], [0, 0, 1, 1], [], []>} : vector<16x512xbf16>, vector<512x384xbf16>, vector<16x384xf32> -> vector<16x384xf32>
    %c0_9 = arith.constant 0 : index
    %c0_10 = arith.constant 0 : index
    %13 = vector.load %arg5[%c0_9, %c0_10] : memref<1x384xf32, #tpu.memory_space<vmem>>, vector<1x384xf32>
    %14 = vector.broadcast %13 : vector<1x384xf32> to vector<16x384xf32>
    %15 = arith.addf %12, %14 : vector<16x384xf32>
    %cst_11 = arith.constant 0.00999999977 : f32
    %16 = vector.broadcast %cst_11 : f32 to vector<16x384xf32>
    %17 = arith.mulf %16, %15 : vector<16x384xf32>
    %18 = arith.maximumf %15, %17 : vector<16x384xf32>
    %19 = arith.truncf %18 : vector<16x384xf32> to vector<16x384xbf16>
    %c0_12 = arith.constant 0 : index
    %c0_13 = arith.constant 0 : index
    %20 = vector.load %arg6[%c0_12, %c0_13] : memref<384x128xbf16, #tpu.memory_space<vmem>>, vector<384x128xbf16>
    %cst_14 = arith.constant dense<0.000000e+00> : vector<16x128xf32>
    %21 = tpu.matmul %19, %20, %cst_14 {dimension_numbers = #tpu.dot_dimension_numbers<[1], [0], [0], [1], [0, 0, 1, 1], [], []>} : vector<16x384xbf16>, vector<384x128xbf16>, vector<16x128xf32> -> vector<16x128xf32>
    %c0_15 = arith.constant 0 : index
    %c0_16 = arith.constant 0 : index
    %22 = vector.load %arg7[%c0_15, %c0_16] : memref<1x128xf32, #tpu.memory_space<vmem>>, vector<1x128xf32>
    %23 = vector.broadcast %22 : vector<1x128xf32> to vector<16x128xf32>
    %24 = arith.addf %21, %23 : vector<16x128xf32>
    %25 = math.tanh %24 : vector<16x128xf32>
    %26 = arith.truncf %25 : vector<16x128xf32> to vector<16x128xbf16>
    %c0_17 = arith.constant 0 : index
    %c0_18 = arith.constant 0 : index
    %27 = vector.load %arg8[%c0_17, %c0_18] : memref<16x128xbf16, #tpu.memory_space<vmem>>, vector<16x128xbf16>
    tpu.vector_store %arg8[%c0_17, %c0_18], %26 {strides = array<i32>} : memref<16x128xbf16, #tpu.memory_space<vmem>>, vector<16x128xbf16>,
    return
  }
  func.func @transform_0(%arg0: i32) -> (i32, i32) {
    %c0_i32 = arith.constant 0 : i32
    %c0_i32_0 = arith.constant 0 : i32
    return %arg0, %c0_i32 : i32, i32
  }
  func.func @transform_1(%arg0: i32) -> (i32, i32) {
    %c0_i32 = arith.constant 0 : i32
    %c0_i32_0 = arith.constant 0 : i32
    %c0_i32_1 = arith.constant 0 : i32
    return %c0_i32, %c0_i32_0 : i32, i32
  }
  func.func @transform_2(%arg0: i32) -> (i32, i32) {
    %c0_i32 = arith.constant 0 : i32
    %c0_i32_0 = arith.constant 0 : i32
    %c0_i32_1 = arith.constant 0 : i32
    return %c0_i32, %c0_i32_0 : i32, i32
  }
  func.func @transform_3(%arg0: i32) -> (i32, i32) {
    %c0_i32 = arith.constant 0 : i32
    %c0_i32_0 = arith.constant 0 : i32
    %c0_i32_1 = arith.constant 0 : i32
    return %c0_i32, %c0_i32_0 : i32, i32
  }
  func.func @transform_4(%arg0: i32) -> (i32, i32) {
    %c0_i32 = arith.constant 0 : i32
    %c0_i32_0 = arith.constant 0 : i32
    %c0_i32_1 = arith.constant 0 : i32
    return %c0_i32, %c0_i32_0 : i32, i32
  }
  func.func @transform_5(%arg0: i32) -> (i32, i32) {
    %c0_i32 = arith.constant 0 : i32
    %c0_i32_0 = arith.constant 0 : i32
    %c0_i32_1 = arith.constant 0 : i32
    return %c0_i32, %c0_i32_0 : i32, i32
  }
  func.func @transform_6(%arg0: i32) -> (i32, i32) {
    %c0_i32 = arith.constant 0 : i32
    %c0_i32_0 = arith.constant 0 : i32
    %c0_i32_1 = arith.constant 0 : i32
    return %c0_i32, %c0_i32_0 : i32, i32
  }
  func.func @transform_7(%arg0: i32) -> (i32, i32) {
    %c0_i32 = arith.constant 0 : i32
    %c0_i32_0 = arith.constant 0 : i32
    return %arg0, %c0_i32 : i32, i32
  }
}

</mosaic_0001>

<llo_original>
// kernel: tpu_custom_call.1
$region0: #{tpu_custom_call.1}
  #allocation0 [shape = 'u32[]', space=smem, size = 0x4, offset = 0x4, fixed_abs, tag = 'smem constant byte address 0x4 - core index']
  #allocation1 [shape = 'u32[144,128]{1,0:T(1,128)}', space=vmem, size = 0x12000, scoped, tag = 'internal scratch']
  %s0 = inlined_call_operand.hbm [shape: f32[16,32], index: 0, kind: input, shape index: {}]
  %s1 = inlined_call_operand.hbm [shape: bf16[32,512], index: 1, kind: input, shape index: {}]
  %s2 = inlined_call_operand.vmem [shape: f32[1,512], index: 2, kind: input, shape index: {}]
  %s3 = inlined_call_operand.hbm [shape: bf16[512,384], index: 3, kind: input, shape index: {}]
  %s4 = inlined_call_operand.vmem [shape: f32[1,384], index: 4, kind: input, shape index: {}]
  %s5 = inlined_call_operand.hbm [shape: bf16[384,128], index: 5, kind: input, shape index: {}]
  %s6 = inlined_call_operand.vmem [shape: f32[1,128], index: 6, kind: input, shape index: {}]
  %s7 = inlined_call_operand.hbm [shape: bf16[16,128], index: 7, kind: output, shape index: {}]
  %s8 = sld [smem:[#allocation0]]
  $region54: #{tpu_custom_call.1} parent=0
    _
  %s10 = ssub.s32 1, %s8
  %s11 = scalar_select 0, %s10, %s8
  $region1: #{tpu_custom_call.1} parent=0
    #allocation2 [shape = 'u8[8192]{0}', space=vmem, size = 0x2000, scoped, tag = 'input window, operand 0, single buffered']
    #allocation3 [shape = 's32[1]{0}', space=sflag, size = 0x4, scoped, tag = 'scoped memory for tpu_custom_call.1']
    #allocation4 [shape = 's32[1]{0}', space=sflag, size = 0x4, scoped, tag = 'scoped memory for tpu_custom_call.1']
    #allocation5 [shape = 'u8[32768]{0}', space=vmem, size = 0x8000, scoped, tag = 'input window, operand 1, single buffered']
    #allocation6 [shape = 's32[1]{0}', space=sflag, size = 0x4, scoped, tag = 'scoped memory for tpu_custom_call.1']
    #allocation7 [shape = 'u8[393216]{0}', space=vmem, size = 0x60000, scoped, tag = 'input window, operand 3, single buffered']
    #allocation8 [shape = 'u8[98304]{0}', space=vmem, size = 0x18000, scoped, tag = 'input window, operand 5, single buffered']
    #allocation9 [shape = 's32[1]{0}', space=sflag, size = 0x4, scoped, tag = 'scoped memory for tpu_custom_call.1']
    #allocation10 [shape = 'u8[4096]{0}', space=vmem, size = 0x1000, scoped, tag = 'output window, operand 0, single buffered']
    %12 = vsyncpa [#allocation3], 0
    %13 = vsyncpa [#allocation6], 0
    %14 = vsyncpa [#allocation9], 0
    %15 = vsyncpa [#allocation4], 0
    // Predicated region
    $region2: #{tpu_custom_call.1} parent=1 // pred_check
      _
    $region3: #{tpu_custom_call.1} parent=1 // pred_check_branch
      %17 = sbr.rel (0) target = $region5
    $region4: #{tpu_custom_call.1} parent=1 // pred_region
      %s19 = ssub.s32 256, 256
      %20 = vsyncadd [#allocation3], %s19
      %s21 = sshll.u32 [#allocation2], 4
      %s22 = int_to_ptr.vmem [resolvable:$true] %s21
      %27 = dma.hbm_to_vmem [thread:$0]  %s0, 256, %s22, [#allocation3], 128, 128, 8
    $region5: #{tpu_custom_call.1} parent=1 // pred_fallthru
      _
    // Predicated region
    $region6: #{tpu_custom_call.1} parent=1 // pred_check
      _
    $region7: #{tpu_custom_call.1} parent=1 // pred_check_branch
      %29 = sbr.rel (0) target = $region9
    $region8: #{tpu_custom_call.1} parent=1 // pred_region
      %s31 = ssub.s32 1024, 1024
      %32 = vsyncadd [#allocation6], %s31
      %s33 = sshll.u32 [#allocation5], 4
      %s34 = int_to_ptr.vmem [resolvable:$true] %s33
      %39 = dma.hbm_to_vmem [thread:$0]  %s1, 1024, %s34, [#allocation6], 256, 256, 16
    $region9: #{tpu_custom_call.1} parent=1 // pred_fallthru
      _
    // Predicated region
    $region10: #{tpu_custom_call.1} parent=1 // pred_check
      _
    $region11: #{tpu_custom_call.1} parent=1 // pred_check_branch
      %41 = sbr.rel (0) target = $region13
    $region12: #{tpu_custom_call.1} parent=1 // pred_region
      _
    $region13: #{tpu_custom_call.1} parent=1 // pred_fallthru
      _
    // Predicated region
    $region14: #{tpu_custom_call.1} parent=1 // pred_check
      _
    $region15: #{tpu_custom_call.1} parent=1 // pred_check_branch
      %43 = sbr.rel (0) target = $region17
    $region16: #{tpu_custom_call.1} parent=1 // pred_region
      %s45 = ssub.s32 12288, 12288
      %46 = vsyncadd [#allocation6], %s45
      %s47 = sshll.u32 [#allocation7], 4
      %s48 = int_to_ptr.vmem [resolvable:$true] %s47
      %53 = dma.hbm_to_vmem [thread:$0]  %s3, 12288, %s48, [#allocation6], 192, 192, 12
    $region17: #{tpu_custom_call.1} parent=1 // pred_fallthru
      _
    // Predicated region
    $region18: #{tpu_custom_call.1} parent=1 // pred_check
      _
    $region19: #{tpu_custom_call.1} parent=1 // pred_check_branch
      %55 = sbr.rel (0) target = $region21
    $region20: #{tpu_custom_call.1} parent=1 // pred_region
      _
    $region21: #{tpu_custom_call.1} parent=1 // pred_fallthru
      _
    // Predicated region
    $region22: #{tpu_custom_call.1} parent=1 // pred_check
      _
    $region23: #{tpu_custom_call.1} parent=1 // pred_check_branch
      %57 = sbr.rel (0) target = $region25
    $region24: #{tpu_custom_call.1} parent=1 // pred_region
      %s59 = ssub.s32 3072, 3072
      %60 = vsyncadd [#allocation9], %s59
      %s61 = sshll.u32 [#allocation8], 4
      %s62 = int_to_ptr.vmem [resolvable:$true] %s61
      %67 = dma.hbm_to_vmem [thread:$0]  %s5, 3072, %s62, [#allocation9], 64, 64, 4
    $region25: #{tpu_custom_call.1} parent=1 // pred_fallthru
      _
    // Predicated region
    $region26: #{tpu_custom_call.1} parent=1 // pred_check
      _
    $region27: #{tpu_custom_call.1} parent=1 // pred_check_branch
      %69 = sbr.rel (0) target = $region29
    $region28: #{tpu_custom_call.1} parent=1 // pred_region
      _
    $region29: #{tpu_custom_call.1} parent=1 // pred_fallthru
      _
    // Predicated region
    $region30: #{tpu_custom_call.1} parent=1 // pred_check
      _
    $region31: #{tpu_custom_call.1} parent=1 // pred_check_branch
      %71 = sbr.rel (0) target = $region33
    $region32: #{tpu_custom_call.1} parent=1 // pred_region
      %72 = dma.done [#allocation3], 256
    $region33: #{tpu_custom_call.1} parent=1 // pred_fallthru
      _
    // Predicated region
    $region34: #{tpu_custom_call.1} parent=1 // pred_check
      _
    $region35: #{tpu_custom_call.1} parent=1 // pred_check_branch
      %74 = sbr.rel (0) target = $region37
    $region36: #{tpu_custom_call.1} parent=1 // pred_region
      %75 = dma.done [#allocation6], 1024
    $region37: #{tpu_custom_call.1} parent=1 // pred_fallthru
      _
    // Predicated region
    $region38: #{tpu_custom_call.1} parent=1 // pred_check
      _
    $region39: #{tpu_custom_call.1} parent=1 // pred_check_branch
      %77 = sbr.rel (0) target = $region41
    $region40: #{tpu_custom_call.1} parent=1 // pred_region
      %78 = dma.done [#allocation6], 12288
    $region41: #{tpu_custom_call.1} parent=1 // pred_fallthru
      _
    // Predicated region
    $region42: #{tpu_custom_call.1} parent=1 // pred_check
      _
    $region43: #{tpu_custom_call.1} parent=1 // pred_check_branch
      %80 = sbr.rel (0) target = $region45
    $region44: #{tpu_custom_call.1} parent=1 // pred_region
      %81 = dma.done [#allocation9], 3072
    $region45: #{tpu_custom_call.1} parent=1 // pred_fallthru
      _
    %v83 = vld [vmem:[#allocation2] sm:$0xff]
    %v84 = vld [vmem:[#allocation2 + $0x8] sm:$0xff]
    %v85 = vpack.c.bf16 %v84, %v83
    %v86 = vld [vmem:[#allocation5] sm:$0xff]
    %v87 = vld [vmem:[#allocation5 + $0x8] sm:$0xff]
    %v88 = vld [vmem:[#allocation5 + $0x10] sm:$0xff]
    %v89 = vld [vmem:[#allocation5 + $0x18] sm:$0xff]
    %v90 = vld [vmem:[#allocation5 + $0x20] sm:$0xff]
    %v91 = vld [vmem:[#allocation5 + $0x28] sm:$0xff]
    %v92 = vld [vmem:[#allocation5 + $0x30] sm:$0xff]
    %v93 = vld [vmem:[#allocation5 + $0x38] sm:$0xff]
    %v94 = vld [vmem:[%s2] sm:$0xf]
    %v96 = vlaneseq
    %v97 = vshrl.u32 %v96, 7
    %v98 = vsub.s32 0, %v97
    %v99 = vrot.slane %v94, %v98
    %v100 = vlaneseq
    %v101 = vshrl.u32 %v100, 7
    %v102 = vsub.s32 1, %v101
    %v103 = vrot.slane %v94, %v102
    %v104 = vlaneseq
    %v105 = vshrl.u32 %v104, 7
    %v106 = vsub.s32 2, %v105
    %v107 = vrot.slane %v94, %v106
    %v108 = vlaneseq
    %v109 = vshrl.u32 %v108, 7
    %v110 = vsub.s32 3, %v109
    %v111 = vrot.slane %v94, %v110
    %v124 = vunpack.c.l.b16 %v86
    %v125 = vunpack.c.h.b16 %v86
    %v126 = vunpack.c.l.b16 %v87
    %v127 = vunpack.c.h.b16 %v87
    %v128 = vunpack.c.l.b16 %v88
    %v129 = vunpack.c.h.b16 %v88
    %v130 = vunpack.c.l.b16 %v89
    %v131 = vunpack.c.h.b16 %v89
    %v132 = vunpack.c.l.b16 %v90
    %v133 = vunpack.c.h.b16 %v90
    %v134 = vunpack.c.l.b16 %v91
    %v135 = vunpack.c.h.b16 %v91
    %v136 = vunpack.c.l.b16 %v92
    %v137 = vunpack.c.h.b16 %v92
    %v138 = vunpack.c.l.b16 %v93
    %v139 = vunpack.c.h.b16 %v93
    %v140 = vpack.c.b16 %v128, %v124
    %v141 = vpack.c.b16 %v129, %v125
    %v142 = vpack.c.b16 %v130, %v126
    %v143 = vpack.c.b16 %v131, %v127
    %v144 = vpack.c.b16 %v136, %v132
    %v145 = vpack.c.b16 %v137, %v133
    %v146 = vpack.c.b16 %v138, %v134
    %v147 = vpack.c.b16 %v139, %v135
    %vm156 = vcmask 261120
    %v158 = vsel %vm156, %v85, 0
    %160 = vmatprep.subr.bf16.mxu0 %v141
    %161 = vmatpush1.bf16.msra.mxu0 %v140
    %162 = vmatprep.subr.bf16.mxu0 %v145
    %163 = vmatpush1.bf16.msra.mxu0 %v144
    %164 = vmatprep.subr.bf16.mxu0 0
    %165 = vmatpush1.bf16.msra.mxu0 0
    %166 = vmatprep.subr.bf16.mxu0 0
    %167 = vmatpush1.bf16.msra.mxu0 0
    %168 = vmatprep.subr.bf16.mxu0 0
    %169 = vmatpush1.bf16.msra.mxu0 0
    %170 = vmatprep.subr.bf16.mxu0 0
    %171 = vmatpush1.bf16.msra.mxu0 0
    %172 = vmatprep.subr.bf16.mxu0 0
    %173 = vmatpush1.bf16.msra.mxu0 0
    %174 = vmatprep.subr.bf16.mxu0 0
    %175 = vmatpush1.bf16.msra.mxu0 0
    %176 = vmatprep.subr.bf16.mxu0 0
    %177 = vmatpush1.bf16.msra.mxu0 0
    %178 = vmatprep.subr.bf16.mxu0 0
    %179 = vmatpush1.bf16.msra.mxu0 0
    %180 = vmatprep.subr.bf16.mxu0 0
    %181 = vmatpush1.bf16.msra.mxu0 0
    %182 = vmatprep.subr.bf16.mxu0 0
    %183 = vmatpush1.bf16.msra.mxu0 0
    %184 = vmatprep.subr.bf16.mxu0 0
    %185 = vmatpush1.bf16.msra.mxu0 0
    %186 = vmatprep.subr.bf16.mxu0 0
    %187 = vmatpush1.bf16.msra.mxu0 0
    %188 = vmatprep.subr.bf16.mxu0 0
    %189 = vmatpush1.bf16.msra.mxu0 0
    %190 = vmatprep.subr.bf16.mxu0 0
    %191 = vmatpush1.bf16.msra.mxu0 0
    %192 = vmatprep.mubr.bf16.mxu0 0
    %193 = vmatmul.mubr.bf16.gmra.mrb[0].mxu0 %v158
    %v194 = vpop.f32.mrb[0].mxu0
    %v195 = vadd.f32 %v99, %v194
    %v196 = vpop.f32.mrb[0].mxu0
    %v197 = vadd.f32 %v103, %v196
    %v198 = vpop.f32.mrb[0].mxu0
    %v199 = vadd.f32 %v99, %v198
    %v200 = vpop.f32.mrb[0].mxu0
    %v201 = vadd.f32 %v103, %v200
    %202 = vdwg.mxu0
    %203 = vmatprep.subr.bf16.mxu0 %v143
    %204 = vmatpush1.bf16.msra.mxu0 %v142
    %205 = vmatprep.subr.bf16.mxu0 %v147
    %206 = vmatpush1.bf16.msra.mxu0 %v146
    %207 = vmatprep.subr.bf16.mxu0 0
    %208 = vmatpush1.bf16.msra.mxu0 0
    %209 = vmatprep.subr.bf16.mxu0 0
    %210 = vmatpush1.bf16.msra.mxu0 0
    %211 = vmatprep.subr.bf16.mxu0 0
    %212 = vmatpush1.bf16.msra.mxu0 0
    %213 = vmatprep.subr.bf16.mxu0 0
    %214 = vmatpush1.bf16.msra.mxu0 0
    %215 = vmatprep.subr.bf16.mxu0 0
    %216 = vmatpush1.bf16.msra.mxu0 0
    %217 = vmatprep.subr.bf16.mxu0 0
    %218 = vmatpush1.bf16.msra.mxu0 0
    %219 = vmatprep.subr.bf16.mxu0 0
    %220 = vmatpush1.bf16.msra.mxu0 0
    %221 = vmatprep.subr.bf16.mxu0 0
    %222 = vmatpush1.bf16.msra.mxu0 0
    %223 = vmatprep.subr.bf16.mxu0 0
    %224 = vmatpush1.bf16.msra.mxu0 0
    %225 = vmatprep.subr.bf16.mxu0 0
    %226 = vmatpush1.bf16.msra.mxu0 0
    %227 = vmatprep.subr.bf16.mxu0 0
    %228 = vmatpush1.bf16.msra.mxu0 0
    %229 = vmatprep.subr.bf16.mxu0 0
    %230 = vmatpush1.bf16.msra.mxu0 0
    %231 = vmatprep.subr.bf16.mxu0 0
    %232 = vmatpush1.bf16.msra.mxu0 0
    %233 = vmatprep.subr.bf16.mxu0 0
    %234 = vmatpush1.bf16.msra.mxu0 0
    %235 = vmatprep.mubr.bf16.mxu0 0
    %236 = vmatmul.mubr.bf16.gmra.mrb[0].mxu0 %v158
    %v237 = vpop.f32.mrb[0].mxu0
    %v238 = vadd.f32 %v107, %v237
    %v239 = vpop.f32.mrb[0].mxu0
    %v240 = vadd.f32 %v111, %v239
    %v241 = vpop.f32.mrb[0].mxu0
    %v242 = vadd.f32 %v107, %v241
    %v243 = vpop.f32.mrb[0].mxu0
    %v244 = vadd.f32 %v111, %v243
    %245 = vdwg.mxu0
    %v246 = vmul.f32 %v195, 0.01
    %v247 = vmul.f32 %v197, 0.01
    %v248 = vmul.f32 %v238, 0.01
    %v249 = vmul.f32 %v240, 0.01
    %v250 = vmul.f32 %v199, 0.01
    %v251 = vmul.f32 %v201, 0.01
    %v252 = vmul.f32 %v242, 0.01
    %v253 = vmul.f32 %v244, 0.01
    %v254 = vmax.f32 %v195, %v246
    %v255 = vmax.f32 %v197, %v247
    %v256 = vmax.f32 %v238, %v248
    %v257 = vmax.f32 %v240, %v249
    %v258 = vmax.f32 %v199, %v250
    %v259 = vmax.f32 %v201, %v251
    %v260 = vmax.f32 %v242, %v252
    %v261 = vmax.f32 %v244, %v253
    %v262 = vpack.c.bf16 %v258, %v254
    %v263 = vpack.c.bf16 %v259, %v255
    %v264 = vpack.c.bf16 %v260, %v256
    %v265 = vpack.c.bf16 %v261, %v257
    %v266 = vld [vmem:[#allocation7] sm:$0xff]
    %v267 = vld [vmem:[#allocation7 + $0x8] sm:$0xf]
    %v268 = vld [vmem:[#allocation7 + $0xc] sm:$0xff]
    %v269 = vld [vmem:[#allocation7 + $0x14] sm:$0xf]
    %v270 = vld [vmem:[#allocation7 + $0x18] sm:$0xff]
    %v271 = vld [vmem:[#allocation7 + $0x20] sm:$0xf]
    %v272 = vld [vmem:[#allocation7 + $0x24] sm:$0xff]
    %v273 = vld [vmem:[#allocation7 + $0x2c] sm:$0xf]
    %v274 = vld [vmem:[#allocation7 + $0x30] sm:$0xff]
    %v275 = vld [vmem:[#allocation7 + $0x38] sm:$0xf]
    %v276 = vld [vmem:[#allocation7 + $0x3c] sm:$0xff]
    %v277 = vld [vmem:[#allocation7 + $0x44] sm:$0xf]
    %v278 = vld [vmem:[#allocation7 + $0x48] sm:$0xff]
    %v279 = vld [vmem:[#allocation7 + $0x50] sm:$0xf]
    %v280 = vld [vmem:[#allocation7 + $0x54] sm:$0xff]
    %v281 = vld [vmem:[#allocation7 + $0x5c] sm:$0xf]
    %v282 = vld [vmem:[#allocation7 + $0x60] sm:$0xff]
    %v283 = vld [vmem:[#allocation7 + $0x68] sm:$0xf]
    %v284 = vld [vmem:[#allocation7 + $0x6c] sm:$0xff]
    %v285 = vld [vmem:[#allocation7 + $0x74] sm:$0xf]
    %v286 = vld [vmem:[#allocation7 + $0x78] sm:$0xff]
    %v287 = vld [vmem:[#allocation7 + $0x80] sm:$0xf]
    %v288 = vld [vmem:[#allocation7 + $0x84] sm:$0xff]
    %v289 = vld [vmem:[#allocation7 + $0x8c] sm:$0xf]
    %v290 = vld [vmem:[#allocation7 + $0x90] sm:$0xff]
    %v291 = vld [vmem:[#allocation7 + $0x98] sm:$0xf]
    %v292 = vld [vmem:[#allocation7 + $0x9c] sm:$0xff]
    %v293 = vld [vmem:[#allocation7 + $0xa4] sm:$0xf]
    %v294 = vld [vmem:[#allocation7 + $0xa8] sm:$0xff]
    %v295 = vld [vmem:[#allocation7 + $0xb0] sm:$0xf]
    %v296 = vld [vmem:[#allocation7 + $0xb4] sm:$0xff]
    %v297 = vld [vmem:[#allocation7 + $0xbc] sm:$0xf]
    %v298 = vld [vmem:[#allocation7 + $0xc0] sm:$0xff]
    %v299 = vld [vmem:[#allocation7 + $0xc8] sm:$0xf]
    %v300 = vld [vmem:[#allocation7 + $0xcc] sm:$0xff]
    %v301 = vld [vmem:[#allocation7 + $0xd4] sm:$0xf]
    %v302 = vld [vmem:[#allocation7 + $0xd8] sm:$0xff]
    %v303 = vld [vmem:[#allocation7 + $0xe0] sm:$0xf]
    %v304 = vld [vmem:[#allocation7 + $0xe4] sm:$0xff]
    %v305 = vld [vmem:[#allocation7 + $0xec] sm:$0xf]
    %v306 = vld [vmem:[#allocation7 + $0xf0] sm:$0xff]
    %v307 = vld [vmem:[#allocation7 + $0xf8] sm:$0xf]
    %v308 = vld [vmem:[#allocation7 + $0xfc] sm:$0xff]
    %v309 = vld [vmem:[#allocation7 + $0x104] sm:$0xf]
    %v310 = vld [vmem:[#allocation7 + $0x108] sm:$0xff]
    %v311 = vld [vmem:[#allocation7 + $0x110] sm:$0xf]
    %v312 = vld [vmem:[#allocation7 + $0x114] sm:$0xff]
    %v313 = vld [vmem:[#allocation7 + $0x11c] sm:$0xf]
    %v314 = vld [vmem:[#allocation7 + $0x120] sm:$0xff]
    %v315 = vld [vmem:[#allocation7 + $0x128] sm:$0xf]
    %v316 = vld [vmem:[#allocation7 + $0x12c] sm:$0xff]
    %v317 = vld [vmem:[#allocation7 + $0x134] sm:$0xf]
    %v318 = vld [vmem:[#allocation7 + $0x138] sm:$0xff]
    %v319 = vld [vmem:[#allocation7 + $0x140] sm:$0xf]
    %v320 = vld [vmem:[#allocation7 + $0x144] sm:$0xff]
    %v321 = vld [vmem:[#allocation7 + $0x14c] sm:$0xf]
    %v322 = vld [vmem:[#allocation7 + $0x150] sm:$0xff]
    %v323 = vld [vmem:[#allocation7 + $0x158] sm:$0xf]
    %v324 = vld [vmem:[#allocation7 + $0x15c] sm:$0xff]
    %v325 = vld [vmem:[#allocation7 + $0x164] sm:$0xf]
    %v326 = vld [vmem:[#allocation7 + $0x168] sm:$0xff]
    %v327 = vld [vmem:[#allocation7 + $0x170] sm:$0xf]
    %v328 = vld [vmem:[#allocation7 + $0x174] sm:$0xff]
    %v329 = vld [vmem:[#allocation7 + $0x17c] sm:$0xf]
    %v330 = vld [vmem:[#allocation7 + $0x180] sm:$0xff]
    %v331 = vld [vmem:[#allocation7 + $0x188] sm:$0xf]
    %v332 = vld [vmem:[#allocation7 + $0x18c] sm:$0xff]
    %v333 = vld [vmem:[#allocation7 + $0x194] sm:$0xf]
    %v334 = vld [vmem:[#allocation7 + $0x198] sm:$0xff]
    %v335 = vld [vmem:[#allocation7 + $0x1a0] sm:$0xf]
    %v336 = vld [vmem:[#allocation7 + $0x1a4] sm:$0xff]
    %v337 = vld [vmem:[#allocation7 + $0x1ac] sm:$0xf]
    %v338 = vld [vmem:[#allocation7 + $0x1b0] sm:$0xff]
    %v339 = vld [vmem:[#allocation7 + $0x1b8] sm:$0xf]
    %v340 = vld [vmem:[#allocation7 + $0x1bc] sm:$0xff]
    %v341 = vld [vmem:[#allocation7 + $0x1c4] sm:$0xf]
    %v342 = vld [vmem:[#allocation7 + $0x1c8] sm:$0xff]
    %v343 = vld [vmem:[#allocation7 + $0x1d0] sm:$0xf]
    %v344 = vld [vmem:[#allocation7 + $0x1d4] sm:$0xff]
    %v345 = vld [vmem:[#allocation7 + $0x1dc] sm:$0xf]
    %v346 = vld [vmem:[#allocation7 + $0x1e0] sm:$0xff]
    %v347 = vld [vmem:[#allocation7 + $0x1e8] sm:$0xf]
    %v348 = vld [vmem:[#allocation7 + $0x1ec] sm:$0xff]
    %v349 = vld [vmem:[#allocation7 + $0x1f4] sm:$0xf]
    %v350 = vld [vmem:[#allocation7 + $0x1f8] sm:$0xff]
    %v351 = vld [vmem:[#allocation7 + $0x200] sm:$0xf]
    %v352 = vld [vmem:[#allocation7 + $0x204] sm:$0xff]
    %v353 = vld [vmem:[#allocation7 + $0x20c] sm:$0xf]
    %v354 = vld [vmem:[#allocation7 + $0x210] sm:$0xff]
    %v355 = vld [vmem:[#allocation7 + $0x218] sm:$0xf]
    %v356 = vld [vmem:[#allocation7 + $0x21c] sm:$0xff]
    %v357 = vld [vmem:[#allocation7 + $0x224] sm:$0xf]
    %v358 = vld [vmem:[#allocation7 + $0x228] sm:$0xff]
    %v359 = vld [vmem:[#allocation7 + $0x230] sm:$0xf]
    %v360 = vld [vmem:[#allocation7 + $0x234] sm:$0xff]
    %v361 = vld [vmem:[#allocation7 + $0x23c] sm:$0xf]
    %v362 = vld [vmem:[#allocation7 + $0x240] sm:$0xff]
    %v363 = vld [vmem:[#allocation7 + $0x248] sm:$0xf]
    %v364 = vld [vmem:[#allocation7 + $0x24c] sm:$0xff]
    %v365 = vld [vmem:[#allocation7 + $0x254] sm:$0xf]
    %v366 = vld [vmem:[#allocation7 + $0x258] sm:$0xff]
    %v367 = vld [vmem:[#allocation7 + $0x260] sm:$0xf]
    %v368 = vld [vmem:[#allocation7 + $0x264] sm:$0xff]
    %v369 = vld [vmem:[#allocation7 + $0x26c] sm:$0xf]
    %v370 = vld [vmem:[#allocation7 + $0x270] sm:$0xff]
    %v371 = vld [vmem:[#allocation7 + $0x278] sm:$0xf]
    %v372 = vld [vmem:[#allocation7 + $0x27c] sm:$0xff]
    %v373 = vld [vmem:[#allocation7 + $0x284] sm:$0xf]
    %v374 = vld [vmem:[#allocation7 + $0x288] sm:$0xff]
    %v375 = vld [vmem:[#allocation7 + $0x290] sm:$0xf]
    %v376 = vld [vmem:[#allocation7 + $0x294] sm:$0xff]
    %v377 = vld [vmem:[#allocation7 + $0x29c] sm:$0xf]
    %v378 = vld [vmem:[#allocation7 + $0x2a0] sm:$0xff]
    %v379 = vld [vmem:[#allocation7 + $0x2a8] sm:$0xf]
    %v380 = vld [vmem:[#allocation7 + $0x2ac] sm:$0xff]
    %v381 = vld [vmem:[#allocation7 + $0x2b4] sm:$0xf]
    %v382 = vld [vmem:[#allocation7 + $0x2b8] sm:$0xff]
    %v383 = vld [vmem:[#allocation7 + $0x2c0] sm:$0xf]
    %v384 = vld [vmem:[#allocation7 + $0x2c4] sm:$0xff]
    %v385 = vld [vmem:[#allocation7 + $0x2cc] sm:$0xf]
    %v386 = vld [vmem:[#allocation7 + $0x2d0] sm:$0xff]
    %v387 = vld [vmem:[#allocation7 + $0x2d8] sm:$0xf]
    %v388 = vld [vmem:[#allocation7 + $0x2dc] sm:$0xff]
    %v389 = vld [vmem:[#allocation7 + $0x2e4] sm:$0xf]
    %v390 = vld [vmem:[#allocation7 + $0x2e8] sm:$0xff]
    %v391 = vld [vmem:[#allocation7 + $0x2f0] sm:$0xf]
    %v392 = vld [vmem:[#allocation7 + $0x2f4] sm:$0xff]
    %v393 = vld [vmem:[#allocation7 + $0x2fc] sm:$0xf]
    %v394 = vld [vmem:[%s4] sm:$0x7]
    %v396 = vlaneseq
    %v397 = vshrl.u32 %v396, 7
    %v398 = vsub.s32 0, %v397
    %v399 = vrot.slane %v394, %v398
    %v400 = vlaneseq
    %v401 = vshrl.u32 %v400, 7
    %v402 = vsub.s32 1, %v401
    %v403 = vrot.slane %v394, %v402
    %v404 = vlaneseq
    %v405 = vshrl.u32 %v404, 7
    %v406 = vsub.s32 2, %v405
    %v407 = vrot.slane %v394, %v406
    %v539 = vunpack.c.l.b16 %v266
    %v540 = vunpack.c.h.b16 %v266
    %v541 = vunpack.c.l.b16 %v267
    %v542 = vunpack.c.l.b16 %v268
    %v543 = vunpack.c.h.b16 %v268
    %v544 = vunpack.c.l.b16 %v269
    %v545 = vunpack.c.l.b16 %v270
    %v546 = vunpack.c.h.b16 %v270
    %v547 = vunpack.c.l.b16 %v271
    %v548 = vunpack.c.l.b16 %v272
    %v549 = vunpack.c.h.b16 %v272
    %v550 = vunpack.c.l.b16 %v273
    %v551 = vunpack.c.l.b16 %v274
    %v552 = vunpack.c.h.b16 %v274
    %v553 = vunpack.c.l.b16 %v275
    %v554 = vunpack.c.l.b16 %v276
    %v555 = vunpack.c.h.b16 %v276
    %v556 = vunpack.c.l.b16 %v277
    %v557 = vunpack.c.l.b16 %v278
    %v558 = vunpack.c.h.b16 %v278
    %v559 = vunpack.c.l.b16 %v279
    %v560 = vunpack.c.l.b16 %v280
    %v561 = vunpack.c.h.b16 %v280
    %v562 = vunpack.c.l.b16 %v281
    %v563 = vunpack.c.l.b16 %v282
    %v564 = vunpack.c.h.b16 %v282
    %v565 = vunpack.c.l.b16 %v283
    %v566 = vunpack.c.l.b16 %v284
    %v567 = vunpack.c.h.b16 %v284
    %v568 = vunpack.c.l.b16 %v285
    %v569 = vunpack.c.l.b16 %v286
    %v570 = vunpack.c.h.b16 %v286
    %v571 = vunpack.c.l.b16 %v287
    %v572 = vunpack.c.l.b16 %v288
    %v573 = vunpack.c.h.b16 %v288
    %v574 = vunpack.c.l.b16 %v289
    %v575 = vunpack.c.l.b16 %v290
    %v576 = vunpack.c.h.b16 %v290
    %v577 = vunpack.c.l.b16 %v291
    %v578 = vunpack.c.l.b16 %v292
    %v579 = vunpack.c.h.b16 %v292
    %v580 = vunpack.c.l.b16 %v293
    %v581 = vunpack.c.l.b16 %v294
    %v582 = vunpack.c.h.b16 %v294
    %v583 = vunpack.c.l.b16 %v295
    %v584 = vunpack.c.l.b16 %v296
    %v585 = vunpack.c.h.b16 %v296
    %v586 = vunpack.c.l.b16 %v297
    %v587 = vunpack.c.l.b16 %v298
    %v588 = vunpack.c.h.b16 %v298
    %v589 = vunpack.c.l.b16 %v299
    %v590 = vunpack.c.l.b16 %v300
    %v591 = vunpack.c.h.b16 %v300
    %v592 = vunpack.c.l.b16 %v301
    %v593 = vunpack.c.l.b16 %v302
    %v594 = vunpack.c.h.b16 %v302
    %v595 = vunpack.c.l.b16 %v303
    %v596 = vunpack.c.l.b16 %v304
    %v597 = vunpack.c.h.b16 %v304
    %v598 = vunpack.c.l.b16 %v305
    %v599 = vunpack.c.l.b16 %v306
    %v600 = vunpack.c.h.b16 %v306
    %v601 = vunpack.c.l.b16 %v307
    %v602 = vunpack.c.l.b16 %v308
    %v603 = vunpack.c.h.b16 %v308
    %v604 = vunpack.c.l.b16 %v309
    %v605 = vunpack.c.l.b16 %v310
    %v606 = vunpack.c.h.b16 %v310
    %v607 = vunpack.c.l.b16 %v311
    %v608 = vunpack.c.l.b16 %v312
    %v609 = vunpack.c.h.b16 %v312
    %v610 = vunpack.c.l.b16 %v313
    %v611 = vunpack.c.l.b16 %v314
    %v612 = vunpack.c.h.b16 %v314
    %v613 = vunpack.c.l.b16 %v315
    %v614 = vunpack.c.l.b16 %v316
    %v615 = vunpack.c.h.b16 %v316
    %v616 = vunpack.c.l.b16 %v317
    %v617 = vunpack.c.l.b16 %v318
    %v618 = vunpack.c.h.b16 %v318
    %v619 = vunpack.c.l.b16 %v319
    %v620 = vunpack.c.l.b16 %v320
    %v621 = vunpack.c.h.b16 %v320
    %v622 = vunpack.c.l.b16 %v321
    %v623 = vunpack.c.l.b16 %v322
    %v624 = vunpack.c.h.b16 %v322
    %v625 = vunpack.c.l.b16 %v323
    %v626 = vunpack.c.l.b16 %v324
    %v627 = vunpack.c.h.b16 %v324
    %v628 = vunpack.c.l.b16 %v325
    %v629 = vunpack.c.l.b16 %v326
    %v630 = vunpack.c.h.b16 %v326
    %v631 = vunpack.c.l.b16 %v327
    %v632 = vunpack.c.l.b16 %v328
    %v633 = vunpack.c.h.b16 %v328
    %v634 = vunpack.c.l.b16 %v329
    %v635 = vunpack.c.l.b16 %v330
    %v636 = vunpack.c.h.b16 %v330
    %v637 = vunpack.c.l.b16 %v331
    %v638 = vunpack.c.l.b16 %v332
    %v639 = vunpack.c.h.b16 %v332
    %v640 = vunpack.c.l.b16 %v333
    %v641 = vunpack.c.l.b16 %v334
    %v642 = vunpack.c.h.b16 %v334
    %v643 = vunpack.c.l.b16 %v335
    %v644 = vunpack.c.l.b16 %v336
    %v645 = vunpack.c.h.b16 %v336
    %v646 = vunpack.c.l.b16 %v337
    %v647 = vunpack.c.l.b16 %v338
    %v648 = vunpack.c.h.b16 %v338
    %v649 = vunpack.c.l.b16 %v339
    %v650 = vunpack.c.l.b16 %v340
    %v651 = vunpack.c.h.b16 %v340
    %v652 = vunpack.c.l.b16 %v341
    %v653 = vunpack.c.l.b16 %v342
    %v654 = vunpack.c.h.b16 %v342
    %v655 = vunpack.c.l.b16 %v343
    %v656 = vunpack.c.l.b16 %v344
    %v657 = vunpack.c.h.b16 %v344
    %v658 = vunpack.c.l.b16 %v345
    %v659 = vunpack.c.l.b16 %v346
    %v660 = vunpack.c.h.b16 %v346
    %v661 = vunpack.c.l.b16 %v347
    %v662 = vunpack.c.l.b16 %v348
    %v663 = vunpack.c.h.b16 %v348
    %v664 = vunpack.c.l.b16 %v349
    %v665 = vunpack.c.l.b16 %v350
    %v666 = vunpack.c.h.b16 %v350
    %v667 = vunpack.c.l.b16 %v351
    %v668 = vunpack.c.l.b16 %v352
    %v669 = vunpack.c.h.b16 %v352
    %v670 = vunpack.c.l.b16 %v353
    %v671 = vunpack.c.l.b16 %v354
    %v672 = vunpack.c.h.b16 %v354
    %v673 = vunpack.c.l.b16 %v355
    %v674 = vunpack.c.l.b16 %v356
    %v675 = vunpack.c.h.b16 %v356
    %v676 = vunpack.c.l.b16 %v357
    %v677 = vunpack.c.l.b16 %v358
    %v678 = vunpack.c.h.b16 %v358
    %v679 = vunpack.c.l.b16 %v359
    %v680 = vunpack.c.l.b16 %v360
    %v681 = vunpack.c.h.b16 %v360
    %v682 = vunpack.c.l.b16 %v361
    %v683 = vunpack.c.l.b16 %v362
    %v684 = vunpack.c.h.b16 %v362
    %v685 = vunpack.c.l.b16 %v363
    %v686 = vunpack.c.l.b16 %v364
    %v687 = vunpack.c.h.b16 %v364
    %v688 = vunpack.c.l.b16 %v365
    %v689 = vunpack.c.l.b16 %v366
    %v690 = vunpack.c.h.b16 %v366
    %v691 = vunpack.c.l.b16 %v367
    %v692 = vunpack.c.l.b16 %v368
    %v693 = vunpack.c.h.b16 %v368
    %v694 = vunpack.c.l.b16 %v369
    %v695 = vunpack.c.l.b16 %v370
    %v696 = vunpack.c.h.b16 %v370
    %v697 = vunpack.c.l.b16 %v371
    %v698 = vunpack.c.l.b16 %v372
    %v699 = vunpack.c.h.b16 %v372
    %v700 = vunpack.c.l.b16 %v373
    %v701 = vunpack.c.l.b16 %v374
    %v702 = vunpack.c.h.b16 %v374
    %v703 = vunpack.c.l.b16 %v375
    %v704 = vunpack.c.l.b16 %v376
    %v705 = vunpack.c.h.b16 %v376
    %v706 = vunpack.c.l.b16 %v377
    %v707 = vunpack.c.l.b16 %v378
    %v708 = vunpack.c.h.b16 %v378
    %v709 = vunpack.c.l.b16 %v379
    %v710 = vunpack.c.l.b16 %v380
    %v711 = vunpack.c.h.b16 %v380
    %v712 = vunpack.c.l.b16 %v381
    %v713 = vunpack.c.l.b16 %v382
    %v714 = vunpack.c.h.b16 %v382
    %v715 = vunpack.c.l.b16 %v383
    %v716 = vunpack.c.l.b16 %v384
    %v717 = vunpack.c.h.b16 %v384
    %v718 = vunpack.c.l.b16 %v385
    %v719 = vunpack.c.l.b16 %v386
    %v720 = vunpack.c.h.b16 %v386
    %v721 = vunpack.c.l.b16 %v387
    %v722 = vunpack.c.l.b16 %v388
    %v723 = vunpack.c.h.b16 %v388
    %v724 = vunpack.c.l.b16 %v389
    %v725 = vunpack.c.l.b16 %v390
    %v726 = vunpack.c.h.b16 %v390
    %v727 = vunpack.c.l.b16 %v391
    %v728 = vunpack.c.l.b16 %v392
    %v729 = vunpack.c.h.b16 %v392
    %v730 = vunpack.c.l.b16 %v393
    %v731 = vpack.c.b16 %v542, %v539
    %v732 = vpack.c.b16 %v543, %v540
    %v733 = vpack.c.b16 %v544, %v541
    %v734 = vpack.c.b16 %v548, %v545
    %v735 = vpack.c.b16 %v549, %v546
    %v736 = vpack.c.b16 %v550, %v547
    %v737 = vpack.c.b16 %v554, %v551
    %v738 = vpack.c.b16 %v555, %v552
    %v739 = vpack.c.b16 %v556, %v553
    %v740 = vpack.c.b16 %v560, %v557
    %v741 = vpack.c.b16 %v561, %v558
    %v742 = vpack.c.b16 %v562, %v559
    %v743 = vpack.c.b16 %v566, %v563
    %v744 = vpack.c.b16 %v567, %v564
    %v745 = vpack.c.b16 %v568, %v565
    %v746 = vpack.c.b16 %v572, %v569
    %v747 = vpack.c.b16 %v573, %v570
    %v748 = vpack.c.b16 %v574, %v571
    %v749 = vpack.c.b16 %v578, %v575
    %v750 = vpack.c.b16 %v579, %v576
    %v751 = vpack.c.b16 %v580, %v577
    %v752 = vpack.c.b16 %v584, %v581
    %v753 = vpack.c.b16 %v585, %v582
    %v754 = vpack.c.b16 %v586, %v583
    %v755 = vpack.c.b16 %v590, %v587
    %v756 = vpack.c.b16 %v591, %v588
    %v757 = vpack.c.b16 %v592, %v589
    %v758 = vpack.c.b16 %v596, %v593
    %v759 = vpack.c.b16 %v597, %v594
    %v760 = vpack.c.b16 %v598, %v595
    %v761 = vpack.c.b16 %v602, %v599
    %v762 = vpack.c.b16 %v603, %v600
    %v763 = vpack.c.b16 %v604, %v601
    %v764 = vpack.c.b16 %v608, %v605
    %v765 = vpack.c.b16 %v609, %v606
    %v766 = vpack.c.b16 %v610, %v607
    %v767 = vpack.c.b16 %v614, %v611
    %v768 = vpack.c.b16 %v615, %v612
    %v769 = vpack.c.b16 %v616, %v613
    %v770 = vpack.c.b16 %v620, %v617
    %v771 = vpack.c.b16 %v621, %v618
    %v772 = vpack.c.b16 %v622, %v619
    %v773 = vpack.c.b16 %v626, %v623
    %v774 = vpack.c.b16 %v627, %v624
    %v775 = vpack.c.b16 %v628, %v625
    %v776 = vpack.c.b16 %v632, %v629
    %v777 = vpack.c.b16 %v633, %v630
    %v778 = vpack.c.b16 %v634, %v631
    %v779 = vpack.c.b16 %v638, %v635
    %v780 = vpack.c.b16 %v639, %v636
    %v781 = vpack.c.b16 %v640, %v637
    %v782 = vpack.c.b16 %v644, %v641
    %v783 = vpack.c.b16 %v645, %v642
    %v784 = vpack.c.b16 %v646, %v643
    %v785 = vpack.c.b16 %v650, %v647
    %v786 = vpack.c.b16 %v651, %v648
    %v787 = vpack.c.b16 %v652, %v649
    %v788 = vpack.c.b16 %v656, %v653
    %v789 = vpack.c.b16 %v657, %v654
    %v790 = vpack.c.b16 %v658, %v655
    %v791 = vpack.c.b16 %v662, %v659
    %v792 = vpack.c.b16 %v663, %v660
    %v793 = vpack.c.b16 %v664, %v661
    %v794 = vpack.c.b16 %v668, %v665
    %v795 = vpack.c.b16 %v669, %v666
    %v796 = vpack.c.b16 %v670, %v667
    %v797 = vpack.c.b16 %v674, %v671
    %v798 = vpack.c.b16 %v675, %v672
    %v799 = vpack.c.b16 %v676, %v673
    %v800 = vpack.c.b16 %v680, %v677
    %v801 = vpack.c.b16 %v681, %v678
    %v802 = vpack.c.b16 %v682, %v679
    %v803 = vpack.c.b16 %v686, %v683
    %v804 = vpack.c.b16 %v687, %v684
    %v805 = vpack.c.b16 %v688, %v685
    %v806 = vpack.c.b16 %v692, %v689
    %v807 = vpack.c.b16 %v693, %v690
    %v808 = vpack.c.b16 %v694, %v691
    %v809 = vpack.c.b16 %v698, %v695
    %v810 = vpack.c.b16 %v699, %v696
    %v811 = vpack.c.b16 %v700, %v697
    %v812 = vpack.c.b16 %v704, %v701
    %v813 = vpack.c.b16 %v705, %v702
    %v814 = vpack.c.b16 %v706, %v703
    %v815 = vpack.c.b16 %v710, %v707
    %v816 = vpack.c.b16 %v711, %v708
    %v817 = vpack.c.b16 %v712, %v709
    %v818 = vpack.c.b16 %v716, %v713
    %v819 = vpack.c.b16 %v717, %v714
    %v820 = vpack.c.b16 %v718, %v715
    %v821 = vpack.c.b16 %v722, %v719
    %v822 = vpack.c.b16 %v723, %v720
    %v823 = vpack.c.b16 %v724, %v721
    %v824 = vpack.c.b16 %v728, %v725
    %v825 = vpack.c.b16 %v729, %v726
    %v826 = vpack.c.b16 %v730, %v727
    %923 = vmatprep.subr.bf16.mxu0 %v732
    %924 = vmatpush1.bf16.msra.mxu0 %v731
    %925 = vmatprep.subr.bf16.mxu0 %v735
    %926 = vmatpush1.bf16.msra.mxu0 %v734
    %927 = vmatprep.subr.bf16.mxu0 %v738
    %928 = vmatpush1.bf16.msra.mxu0 %v737
    %929 = vmatprep.subr.bf16.mxu0 %v741
    %930 = vmatpush1.bf16.msra.mxu0 %v740
    %931 = vmatprep.subr.bf16.mxu0 %v744
    %932 = vmatpush1.bf16.msra.mxu0 %v743
    %933 = vmatprep.subr.bf16.mxu0 %v747
    %934 = vmatpush1.bf16.msra.mxu0 %v746
    %935 = vmatprep.subr.bf16.mxu0 %v750
    %936 = vmatpush1.bf16.msra.mxu0 %v749
    %937 = vmatprep.subr.bf16.mxu0 %v753
    %938 = vmatpush1.bf16.msra.mxu0 %v752
    %939 = vmatprep.subr.bf16.mxu0 %v756
    %940 = vmatpush1.bf16.msra.mxu0 %v755
    %941 = vmatprep.subr.bf16.mxu0 %v759
    %942 = vmatpush1.bf16.msra.mxu0 %v758
    %943 = vmatprep.subr.bf16.mxu0 %v762
    %944 = vmatpush1.bf16.msra.mxu0 %v761
    %945 = vmatprep.subr.bf16.mxu0 %v765
    %946 = vmatpush1.bf16.msra.mxu0 %v764
    %947 = vmatprep.subr.bf16.mxu0 %v768
    %948 = vmatpush1.bf16.msra.mxu0 %v767
    %949 = vmatprep.subr.bf16.mxu0 %v771
    %950 = vmatpush1.bf16.msra.mxu0 %v770
    %951 = vmatprep.subr.bf16.mxu0 %v774
    %952 = vmatpush1.bf16.msra.mxu0 %v773
    %953 = vmatprep.subr.bf16.mxu0 %v777
    %954 = vmatpush1.bf16.msra.mxu0 %v776
    %955 = vmatprep.mubr.bf16.mxu0 %v263
    %956 = vmatmul.mubr.bf16.gmra.mrb[0].mxu0 %v262
    %v957 = vpop.f32.mrb[0].mxu0
    %v958 = vadd.f32 %v399, %v957
    %v959 = vpop.f32.mrb[0].mxu0
    %v960 = vadd.f32 %v403, %v959
    %v961 = vpop.f32.mrb[0].mxu0
    %v962 = vadd.f32 %v399, %v961
    %v963 = vpop.f32.mrb[0].mxu0
    %v964 = vadd.f32 %v403, %v963
    %965 = vdwg.mxu0
    %966 = vmatprep.subr.bf16.mxu0 %v780
    %967 = vmatpush1.bf16.msra.mxu0 %v779
    %968 = vmatprep.subr.bf16.mxu0 %v783
    %969 = vmatpush1.bf16.msra.mxu0 %v782
    %970 = vmatprep.subr.bf16.mxu0 %v786
    %971 = vmatpush1.bf16.msra.mxu0 %v785
    %972 = vmatprep.subr.bf16.mxu0 %v789
    %973 = vmatpush1.bf16.msra.mxu0 %v788
    %974 = vmatprep.subr.bf16.mxu0 %v792
    %975 = vmatpush1.bf16.msra.mxu0 %v791
    %976 = vmatprep.subr.bf16.mxu0 %v795
    %977 = vmatpush1.bf16.msra.mxu0 %v794
    %978 = vmatprep.subr.bf16.mxu0 %v798
    %979 = vmatpush1.bf16.msra.mxu0 %v797
    %980 = vmatprep.subr.bf16.mxu0 %v801
    %981 = vmatpush1.bf16.msra.mxu0 %v800
    %982 = vmatprep.subr.bf16.mxu0 %v804
    %983 = vmatpush1.bf16.msra.mxu0 %v803
    %984 = vmatprep.subr.bf16.mxu0 %v807
    %985 = vmatpush1.bf16.msra.mxu0 %v806
    %986 = vmatprep.subr.bf16.mxu0 %v810
    %987 = vmatpush1.bf16.msra.mxu0 %v809
    %988 = vmatprep.subr.bf16.mxu0 %v813
    %989 = vmatpush1.bf16.msra.mxu0 %v812
    %990 = vmatprep.subr.bf16.mxu0 %v816
    %991 = vmatpush1.bf16.msra.mxu0 %v815
    %992 = vmatprep.subr.bf16.mxu0 %v819
    %993 = vmatpush1.bf16.msra.mxu0 %v818
    %994 = vmatprep.subr.bf16.mxu0 %v822
    %995 = vmatpush1.bf16.msra.mxu0 %v821
    %996 = vmatprep.subr.bf16.mxu0 %v825
    %997 = vmatpush1.bf16.msra.mxu0 %v824
    %998 = vmatprep.mubr.bf16.mxu0 %v265
    %999 = vmatmul.mubr.bf16.gmra.mrb[0].mxu0 %v264
    %v1000 = vpop.f32.mrb[0].mxu0
    %v1001 = vadd.f32 %v958, %v1000
    %v1002 = vpop.f32.mrb[0].mxu0
    %v1003 = vadd.f32 %v960, %v1002
    %v1004 = vpop.f32.mrb[0].mxu0
    %v1005 = vadd.f32 %v962, %v1004
    %v1006 = vpop.f32.mrb[0].mxu0
    %v1007 = vadd.f32 %v964, %v1006
    %1008 = vdwg.mxu0
    %1009 = vmatprep.subr.bf16.mxu0 0
    %1010 = vmatpush1.bf16.msra.mxu0 %v733
    %1011 = vmatprep.subr.bf16.mxu0 0
    %1012 = vmatpush1.bf16.msra.mxu0 %v736
    %1013 = vmatprep.subr.bf16.mxu0 0
    %1014 = vmatpush1.bf16.msra.mxu0 %v739
    %1015 = vmatprep.subr.bf16.mxu0 0
    %1016 = vmatpush1.bf16.msra.mxu0 %v742
    %1017 = vmatprep.subr.bf16.mxu0 0
    %1018 = vmatpush1.bf16.msra.mxu0 %v745
    %1019 = vmatprep.subr.bf16.mxu0 0
    %1020 = vmatpush1.bf16.msra.mxu0 %v748
    %1021 = vmatprep.subr.bf16.mxu0 0
    %1022 = vmatpush1.bf16.msra.mxu0 %v751
    %1023 = vmatprep.subr.bf16.mxu0 0
    %1024 = vmatpush1.bf16.msra.mxu0 %v754
    %1025 = vmatprep.subr.bf16.mxu0 0
    %1026 = vmatpush1.bf16.msra.mxu0 %v757
    %1027 = vmatprep.subr.bf16.mxu0 0
    %1028 = vmatpush1.bf16.msra.mxu0 %v760
    %1029 = vmatprep.subr.bf16.mxu0 0
    %1030 = vmatpush1.bf16.msra.mxu0 %v763
    %1031 = vmatprep.subr.bf16.mxu0 0
    %1032 = vmatpush1.bf16.msra.mxu0 %v766
    %1033 = vmatprep.subr.bf16.mxu0 0
    %1034 = vmatpush1.bf16.msra.mxu0 %v769
    %1035 = vmatprep.subr.bf16.mxu0 0
    %1036 = vmatpush1.bf16.msra.mxu0 %v772
    %1037 = vmatprep.subr.bf16.mxu0 0
    %1038 = vmatpush1.bf16.msra.mxu0 %v775
    %1039 = vmatprep.subr.bf16.mxu0 0
    %1040 = vmatpush1.bf16.msra.mxu0 %v778
    %1041 = vmatprep.mubr.bf16.mxu0 %v263
    %1042 = vmatmul.mubr.bf16.gmra.mrb[0].mxu0 %v262
    %v1043 = vpop.f32.mrb[0].mxu0
    %v1044 = vadd.f32 %v407, %v1043
    %v1045 = vpop.f32.mrb[0].mxu0
    %v1046 = vpop.f32.mrb[0].mxu0
    %v1047 = vadd.f32 %v407, %v1046
    %v1048 = vpop.f32.mrb[0].mxu0
    %1049 = vdwg.mxu0
    %1050 = vmatprep.subr.bf16.mxu0 0
    %1051 = vmatpush1.bf16.msra.mxu0 %v781
    %1052 = vmatprep.subr.bf16.mxu0 0
    %1053 = vmatpush1.bf16.msra.mxu0 %v784
    %1054 = vmatprep.subr.bf16.mxu0 0
    %1055 = vmatpush1.bf16.msra.mxu0 %v787
    %1056 = vmatprep.subr.bf16.mxu0 0
    %1057 = vmatpush1.bf16.msra.mxu0 %v790
    %1058 = vmatprep.subr.bf16.mxu0 0
    %1059 = vmatpush1.bf16.msra.mxu0 %v793
    %1060 = vmatprep.subr.bf16.mxu0 0
    %1061 = vmatpush1.bf16.msra.mxu0 %v796
    %1062 = vmatprep.subr.bf16.mxu0 0
    %1063 = vmatpush1.bf16.msra.mxu0 %v799
    %1064 = vmatprep.subr.bf16.mxu0 0
    %1065 = vmatpush1.bf16.msra.mxu0 %v802
    %1066 = vmatprep.subr.bf16.mxu0 0
    %1067 = vmatpush1.bf16.msra.mxu0 %v805
    %1068 = vmatprep.subr.bf16.mxu0 0
    %1069 = vmatpush1.bf16.msra.mxu0 %v808
    %1070 = vmatprep.subr.bf16.mxu0 0
    %1071 = vmatpush1.bf16.msra.mxu0 %v811
    %1072 = vmatprep.subr.bf16.mxu0 0
    %1073 = vmatpush1.bf16.msra.mxu0 %v814
    %1074 = vmatprep.subr.bf16.mxu0 0
    %1075 = vmatpush1.bf16.msra.mxu0 %v817
    %1076 = vmatprep.subr.bf16.mxu0 0
    %1077 = vmatpush1.bf16.msra.mxu0 %v820
    %1078 = vmatprep.subr.bf16.mxu0 0
    %1079 = vmatpush1.bf16.msra.mxu0 %v823
    %1080 = vmatprep.subr.bf16.mxu0 0
    %1081 = vmatpush1.bf16.msra.mxu0 %v826
    %1082 = vmatprep.mubr.bf16.mxu0 %v265
    %1083 = vmatmul.mubr.bf16.gmra.mrb[0].mxu0 %v264
    %v1084 = vpop.f32.mrb[0].mxu0
    %v1085 = vadd.f32 %v1044, %v1084
    %v1086 = vpop.f32.mrb[0].mxu0
    %v1087 = vpop.f32.mrb[0].mxu0
    %v1088 = vadd.f32 %v1047, %v1087
    %v1089 = vpop.f32.mrb[0].mxu0
    %1090 = vdwg.mxu0
    %v1091 = vmul.f32 %v1001, 0.01
    %v1092 = vmul.f32 %v1003, 0.01
    %v1093 = vmul.f32 %v1085, 0.01
    %v1094 = vmul.f32 %v1005, 0.01
    %v1095 = vmul.f32 %v1007, 0.01
    %v1096 = vmul.f32 %v1088, 0.01
    %v1097 = vmax.f32 %v1001, %v1091
    %v1098 = vmax.f32 %v1003, %v1092
    %v1099 = vmax.f32 %v1085, %v1093
    %v1100 = vmax.f32 %v1005, %v1094
    %v1101 = vmax.f32 %v1007, %v1095
    %v1102 = vmax.f32 %v1088, %v1096
    %v1103 = vpack.c.bf16 %v1100, %v1097
    %v1104 = vpack.c.bf16 %v1101, %v1098
    %v1105 = vpack.c.bf16 %v1102, %v1099
    %v1106 = vld [vmem:[#allocation8] sm:$0xf]
    %v1107 = vld [vmem:[#allocation8 + $0x4] sm:$0xf]
    %v1108 = vld [vmem:[#allocation8 + $0x8] sm:$0xf]
    %v1109 = vld [vmem:[#allocation8 + $0xc] sm:$0xf]
    %v1110 = vld [vmem:[#allocation8 + $0x10] sm:$0xf]
    %v1111 = vld [vmem:[#allocation8 + $0x14] sm:$0xf]
    %v1112 = vld [vmem:[#allocation8 + $0x18] sm:$0xf]
    %v1113 = vld [vmem:[#allocation8 + $0x1c] sm:$0xf]
    %v1114 = vld [vmem:[#allocation8 + $0x20] sm:$0xf]
    %v1115 = vld [vmem:[#allocation8 + $0x24] sm:$0xf]
    %v1116 = vld [vmem:[#allocation8 + $0x28] sm:$0xf]
    %v1117 = vld [vmem:[#allocation8 + $0x2c] sm:$0xf]
    %v1118 = vld [vmem:[#allocation8 + $0x30] sm:$0xf]
    %v1119 = vld [vmem:[#allocation8 + $0x34] sm:$0xf]
    %v1120 = vld [vmem:[#allocation8 + $0x38] sm:$0xf]
    %v1121 = vld [vmem:[#allocation8 + $0x3c] sm:$0xf]
    %v1122 = vld [vmem:[#allocation8 + $0x40] sm:$0xf]
    %v1123 = vld [vmem:[#allocation8 + $0x44] sm:$0xf]
    %v1124 = vld [vmem:[#allocation8 + $0x48] sm:$0xf]
    %v1125 = vld [vmem:[#allocation8 + $0x4c] sm:$0xf]
    %v1126 = vld [vmem:[#allocation8 + $0x50] sm:$0xf]
    %v1127 = vld [vmem:[#allocation8 + $0x54] sm:$0xf]
    %v1128 = vld [vmem:[#allocation8 + $0x58] sm:$0xf]
    %v1129 = vld [vmem:[#allocation8 + $0x5c] sm:$0xf]
    %v1130 = vld [vmem:[#allocation8 + $0x60] sm:$0xf]
    %v1131 = vld [vmem:[#allocation8 + $0x64] sm:$0xf]
    %v1132 = vld [vmem:[#allocation8 + $0x68] sm:$0xf]
    %v1133 = vld [vmem:[#allocation8 + $0x6c] sm:$0xf]
    %v1134 = vld [vmem:[#allocation8 + $0x70] sm:$0xf]
    %v1135 = vld [vmem:[#allocation8 + $0x74] sm:$0xf]
    %v1136 = vld [vmem:[#allocation8 + $0x78] sm:$0xf]
    %v1137 = vld [vmem:[#allocation8 + $0x7c] sm:$0xf]
    %v1138 = vld [vmem:[#allocation8 + $0x80] sm:$0xf]
    %v1139 = vld [vmem:[#allocation8 + $0x84] sm:$0xf]
    %v1140 = vld [vmem:[#allocation8 + $0x88] sm:$0xf]
    %v1141 = vld [vmem:[#allocation8 + $0x8c] sm:$0xf]
    %v1142 = vld [vmem:[#allocation8 + $0x90] sm:$0xf]
    %v1143 = vld [vmem:[#allocation8 + $0x94] sm:$0xf]
    %v1144 = vld [vmem:[#allocation8 + $0x98] sm:$0xf]
    %v1145 = vld [vmem:[#allocation8 + $0x9c] sm:$0xf]
    %v1146 = vld [vmem:[#allocation8 + $0xa0] sm:$0xf]
    %v1147 = vld [vmem:[#allocation8 + $0xa4] sm:$0xf]
    %v1148 = vld [vmem:[#allocation8 + $0xa8] sm:$0xf]
    %v1149 = vld [vmem:[#allocation8 + $0xac] sm:$0xf]
    %v1150 = vld [vmem:[#allocation8 + $0xb0] sm:$0xf]
    %v1151 = vld [vmem:[#allocation8 + $0xb4] sm:$0xf]
    %v1152 = vld [vmem:[#allocation8 + $0xb8] sm:$0xf]
    %v1153 = vld [vmem:[#allocation8 + $0xbc] sm:$0xf]
    %v1154 = vld [vmem:[%s6] sm:$0x1]
    %v1156 = vlaneseq
    %v1157 = vshrl.u32 %v1156, 7
    %v1158 = vsub.s32 0, %v1157
    %v1159 = vrot.slane %v1154, %v1158
    %v1209 = vunpack.c.l.b16 %v1106
    %v1210 = vunpack.c.l.b16 %v1107
    %v1211 = vunpack.c.l.b16 %v1108
    %v1212 = vunpack.c.l.b16 %v1109
    %v1213 = vunpack.c.l.b16 %v1110
    %v1214 = vunpack.c.l.b16 %v1111
    %v1215 = vunpack.c.l.b16 %v1112
    %v1216 = vunpack.c.l.b16 %v1113
    %v1217 = vunpack.c.l.b16 %v1114
    %v1218 = vunpack.c.l.b16 %v1115
    %v1219 = vunpack.c.l.b16 %v1116
    %v1220 = vunpack.c.l.b16 %v1117
    %v1221 = vunpack.c.l.b16 %v1118
    %v1222 = vunpack.c.l.b16 %v1119
    %v1223 = vunpack.c.l.b16 %v1120
    %v1224 = vunpack.c.l.b16 %v1121
    %v1225 = vunpack.c.l.b16 %v1122
    %v1226 = vunpack.c.l.b16 %v1123
    %v1227 = vunpack.c.l.b16 %v1124
    %v1228 = vunpack.c.l.b16 %v1125
    %v1229 = vunpack.c.l.b16 %v1126
    %v1230 = vunpack.c.l.b16 %v1127
    %v1231 = vunpack.c.l.b16 %v1128
    %v1232 = vunpack.c.l.b16 %v1129
    %v1233 = vunpack.c.l.b16 %v1130
    %v1234 = vunpack.c.l.b16 %v1131
    %v1235 = vunpack.c.l.b16 %v1132
    %v1236 = vunpack.c.l.b16 %v1133
    %v1237 = vunpack.c.l.b16 %v1134
    %v1238 = vunpack.c.l.b16 %v1135
    %v1239 = vunpack.c.l.b16 %v1136
    %v1240 = vunpack.c.l.b16 %v1137
    %v1241 = vunpack.c.l.b16 %v1138
    %v1242 = vunpack.c.l.b16 %v1139
    %v1243 = vunpack.c.l.b16 %v1140
    %v1244 = vunpack.c.l.b16 %v1141
    %v1245 = vunpack.c.l.b16 %v1142
    %v1246 = vunpack.c.l.b16 %v1143
    %v1247 = vunpack.c.l.b16 %v1144
    %v1248 = vunpack.c.l.b16 %v1145
    %v1249 = vunpack.c.l.b16 %v1146
    %v1250 = vunpack.c.l.b16 %v1147
    %v1251 = vunpack.c.l.b16 %v1148
    %v1252 = vunpack.c.l.b16 %v1149
    %v1253 = vunpack.c.l.b16 %v1150
    %v1254 = vunpack.c.l.b16 %v1151
    %v1255 = vunpack.c.l.b16 %v1152
    %v1256 = vunpack.c.l.b16 %v1153
    %v1257 = vpack.c.b16 %v1210, %v1209
    %v1258 = vpack.c.b16 %v1212, %v1211
    %v1259 = vpack.c.b16 %v1214, %v1213
    %v1260 = vpack.c.b16 %v1216, %v1215
    %v1261 = vpack.c.b16 %v1218, %v1217
    %v1262 = vpack.c.b16 %v1220, %v1219
    %v1263 = vpack.c.b16 %v1222, %v1221
    %v1264 = vpack.c.b16 %v1224, %v1223
    %v1265 = vpack.c.b16 %v1226, %v1225
    %v1266 = vpack.c.b16 %v1228, %v1227
    %v1267 = vpack.c.b16 %v1230, %v1229
    %v1268 = vpack.c.b16 %v1232, %v1231
    %v1269 = vpack.c.b16 %v1234, %v1233
    %v1270 = vpack.c.b16 %v1236, %v1235
    %v1271 = vpack.c.b16 %v1238, %v1237
    %v1272 = vpack.c.b16 %v1240, %v1239
    %v1273 = vpack.c.b16 %v1242, %v1241
    %v1274 = vpack.c.b16 %v1244, %v1243
    %v1275 = vpack.c.b16 %v1246, %v1245
    %v1276 = vpack.c.b16 %v1248, %v1247
    %v1277 = vpack.c.b16 %v1250, %v1249
    %v1278 = vpack.c.b16 %v1252, %v1251
    %v1279 = vpack.c.b16 %v1254, %v1253
    %v1280 = vpack.c.b16 %v1256, %v1255
    %1305 = vmatprep.subr.bf16.mxu0 0
    %1306 = vmatpush1.bf16.msra.mxu0 %v1257
    %1307 = vmatprep.subr.bf16.mxu0 0
    %1308 = vmatpush1.bf16.msra.mxu0 %v1258
    %1309 = vmatprep.subr.bf16.mxu0 0
    %1310 = vmatpush1.bf16.msra.mxu0 %v1259
    %1311 = vmatprep.subr.bf16.mxu0 0
    %1312 = vmatpush1.bf16.msra.mxu0 %v1260
    %1313 = vmatprep.subr.bf16.mxu0 0
    %1314 = vmatpush1.bf16.msra.mxu0 %v1261
    %1315 = vmatprep.subr.bf16.mxu0 0
    %1316 = vmatpush1.bf16.msra.mxu0 %v1262
    %1317 = vmatprep.subr.bf16.mxu0 0
    %1318 = vmatpush1.bf16.msra.mxu0 %v1263
    %1319 = vmatprep.subr.bf16.mxu0 0
    %1320 = vmatpush1.bf16.msra.mxu0 %v1264
    %1321 = vmatprep.subr.bf16.mxu0 0
    %1322 = vmatpush1.bf16.msra.mxu0 %v1265
    %1323 = vmatprep.subr.bf16.mxu0 0
    %1324 = vmatpush1.bf16.msra.mxu0 %v1266
    %1325 = vmatprep.subr.bf16.mxu0 0
    %1326 = vmatpush1.bf16.msra.mxu0 %v1267
    %1327 = vmatprep.subr.bf16.mxu0 0
    %1328 = vmatpush1.bf16.msra.mxu0 %v1268
    %1329 = vmatprep.subr.bf16.mxu0 0
    %1330 = vmatpush1.bf16.msra.mxu0 %v1269
    %1331 = vmatprep.subr.bf16.mxu0 0
    %1332 = vmatpush1.bf16.msra.mxu0 %v1270
    %1333 = vmatprep.subr.bf16.mxu0 0
    %1334 = vmatpush1.bf16.msra.mxu0 %v1271
    %1335 = vmatprep.subr.bf16.mxu0 0
    %1336 = vmatpush1.bf16.msra.mxu0 %v1272
    %1337 = vmatprep.mubr.bf16.mxu0 %v1104
    %1338 = vmatmul.mubr.bf16.gmra.mrb[0].mxu0 %v1103
    %v1339 = vpop.f32.mrb[0].mxu0
    %v1340 = vadd.f32 %v1159, %v1339
    %v1341 = vpop.f32.mrb[0].mxu0
    %v1342 = vpop.f32.mrb[0].mxu0
    %v1343 = vadd.f32 %v1159, %v1342
    %v1344 = vpop.f32.mrb[0].mxu0
    %1345 = vdwg.mxu0
    %1346 = vmatprep.subr.bf16.mxu0 0
    %1347 = vmatpush1.bf16.msra.mxu0 %v1273
    %1348 = vmatprep.subr.bf16.mxu0 0
    %1349 = vmatpush1.bf16.msra.mxu0 %v1274
    %1350 = vmatprep.subr.bf16.mxu0 0
    %1351 = vmatpush1.bf16.msra.mxu0 %v1275
    %1352 = vmatprep.subr.bf16.mxu0 0
    %1353 = vmatpush1.bf16.msra.mxu0 %v1276
    %1354 = vmatprep.subr.bf16.mxu0 0
    %1355 = vmatpush1.bf16.msra.mxu0 %v1277
    %1356 = vmatprep.subr.bf16.mxu0 0
    %1357 = vmatpush1.bf16.msra.mxu0 %v1278
    %1358 = vmatprep.subr.bf16.mxu0 0
    %1359 = vmatpush1.bf16.msra.mxu0 %v1279
    %1360 = vmatprep.subr.bf16.mxu0 0
    %1361 = vmatpush1.bf16.msra.mxu0 %v1280
    %1362 = vmatprep.subr.bf16.mxu0 0
    %1363 = vmatpush1.bf16.msra.mxu0 0
    %1364 = vmatprep.subr.bf16.mxu0 0
    %1365 = vmatpush1.bf16.msra.mxu0 0
    %1366 = vmatprep.subr.bf16.mxu0 0
    %1367 = vmatpush1.bf16.msra.mxu0 0
    %1368 = vmatprep.subr.bf16.mxu0 0
    %1369 = vmatpush1.bf16.msra.mxu0 0
    %1370 = vmatprep.subr.bf16.mxu0 0
    %1371 = vmatpush1.bf16.msra.mxu0 0
    %1372 = vmatprep.subr.bf16.mxu0 0
    %1373 = vmatpush1.bf16.msra.mxu0 0
    %1374 = vmatprep.subr.bf16.mxu0 0
    %1375 = vmatpush1.bf16.msra.mxu0 0
    %1376 = vmatprep.subr.bf16.mxu0 0
    %1377 = vmatpush1.bf16.msra.mxu0 0
    %1378 = vmatprep.mubr.bf16.mxu0 0
    %1379 = vmatmul.mubr.bf16.gmra.mrb[0].mxu0 %v1105
    %v1380 = vpop.f32.mrb[0].mxu0
    %v1381 = vadd.f32 %v1340, %v1380
    %v1382 = vpop.f32.mrb[0].mxu0
    %v1383 = vpop.f32.mrb[0].mxu0
    %v1384 = vadd.f32 %v1343, %v1383
    %v1385 = vpop.f32.mrb[0].mxu0
    %1386 = vdwg.mxu0
    %v1387 = vtanh.pop %v1381
    %v1388 = vtanh.pop %v1384
    %v1389 = vpack.c.bf16 %v1388, %v1387
    %v1391 = vunpack.c.l.b16 %v1389
    %v1392 = vunpack.c.h.b16 %v1389
    %v1393 = vpack.c.b16 %v1391, %v1391
    %v1394 = vpack.c.b16 %v1392, %v1392
    %1397 = vst [vmem:[#allocation10] sm:$0xf] %v1393
    %1398 = vst [vmem:[#allocation10 + $0x4] sm:$0xf] %v1394
    // Predicated region
    $region46: #{tpu_custom_call.1} parent=1 // pred_check
      _
    $region47: #{tpu_custom_call.1} parent=1 // pred_check_branch
      %1400 = sbr.rel (0) target = $region49
    $region48: #{tpu_custom_call.1} parent=1 // pred_region
      %s1402 = ssub.s32 128, 128
      %1403 = vsyncadd [#allocation4], %s1402
      %s1404 = sshll.u32 [#allocation10], 4
      %s1405 = int_to_ptr.vmem [resolvable:$true] %s1404
      %1410 = dma.vmem_to_hbm [thread:$0]  %s1405, 128, %s7, [#allocation4], 64, 64, 4
    $region49: #{tpu_custom_call.1} parent=1 // pred_fallthru
      _
    // Predicated region
    $region50: #{tpu_custom_call.1} parent=1 // pred_check
      _
    $region51: #{tpu_custom_call.1} parent=1 // pred_check_branch
      %1412 = sbr.rel (0) target = $region53
    $region52: #{tpu_custom_call.1} parent=1 // pred_region
      %1413 = dma.done [#allocation4], 128
    $region53: #{tpu_custom_call.1} parent=1 // pred_fallthru
      _
    %1414 = vsyncpa [#allocation3], 1
    %1415 = vsyncpa [#allocation6], 1
    %1416 = vsyncpa [#allocation9], 1
    %1417 = vsyncpa [#allocation4], 1

</llo_original>
